<compile_context>
chip_gen: v7x
topology: tpu7x:2x2x1
jax: 0.10.0
libtpu: 0.0.40
codegen_flags: <defaults>
</compile_context>

<pallas_src>
import jax
import jax.numpy as jnp
from jax.experimental import pallas as pl
from jax.experimental.pallas import tpu as pltpu


def atu_kernel(x_ref, alpha_ref, beta_ref, o_ref):
    # x_ref: (tm, L)   alpha_ref/beta_ref: (1, L) -> broadcast over rows (sublane axis)
    o_ref[...] = x_ref[...] * alpha_ref[...] + beta_ref[...]


def atu_forward(x, alpha, beta, *, row_tile=2048, donate_input=False):
    """Affine transform: alpha * x + beta, alpha/beta broadcast over the last axis.

    x: [..., D]   alpha, beta: [D]
    """
    orig_shape = x.shape
    D = orig_shape[-1]
    total = x.size
    M = total // D
    dtype = x.dtype
    itemsize = jnp.dtype(dtype).itemsize

    # ---- lane-dense layout: fold rows into the 128-lane axis when possible ----
    if D < 128 and 128 % D == 0 and M % (128 // D) == 0:
        fold = 128 // D
        L = 128
        rows = M // fold
        alpha_lane = jnp.tile(alpha.astype(dtype), fold).reshape(1, L)
        beta_lane = jnp.tile(beta.astype(dtype), fold).reshape(1, L)
    else:
        L = D
        rows = M
        alpha_lane = alpha.astype(dtype).reshape(1, L)
        beta_lane = beta.astype(dtype).reshape(1, L)

    x2d = x.reshape(rows, L)

    # ---- row tile: as large as fits a modest per-block VMEM budget ----
    # budget ~2 MiB per input tile -> with in+out, double-buffered ~= 8 MiB,
    # comfortably under scoped VMEM on v5e/v6e (128 MiB) and v7x (64 MiB).
    max_block_bytes = 2 * 1024 * 1024
    tm_cap = max(8, (max_block_bytes // (L * itemsize)) // 8 * 8)
    tm = min(row_tile, tm_cap)
    if rows <= tm:
        tm = rows            # full-extent block: single grid step, no masking needed
    grid = (pl.cdiv(rows, tm),)  # ragged last block handled by Pallas (masked writes)

    cost = pl.CostEstimate(
        flops=2 * rows * L,
        transcendentals=0,
        bytes_accessed=(2 * rows * L + 2 * L) * itemsize,
    )

    out = pl.pallas_call(
        atu_kernel,
        out_shape=jax.ShapeDtypeStruct((rows, L), dtype),
        grid_spec=pltpu.PrefetchScalarGridSpec(
            num_scalar_prefetch=0,
            grid=grid,
            in_specs=[
                pl.BlockSpec((tm, L), lambda i: (i, 0)),   # x tile
                pl.BlockSpec((1, L), lambda i: (0, 0)),    # alpha (resident)
                pl.BlockSpec((1, L), lambda i: (0, 0)),    # beta  (resident)
            ],
            out_specs=pl.BlockSpec((tm, L), lambda i: (i, 0)),
        ),
        compiler_params=pltpu.CompilerParams(
            dimension_semantics=("parallel",),
        ),
        cost_estimate=cost,
        input_output_aliases={0: 0} if donate_input else {},
    )(x2d, alpha_lane, beta_lane)

    return out.reshape(orig_shape)


if __name__ == "__main__":
    # Module config: input_dim = 32, alpha init 'ones', beta init 'zeros'
    input_dim = 32
    batch, seq = 2, 8

    key = jax.random.PRNGKey(0)
    x = jax.random.normal(key, (batch, seq, input_dim), dtype=jnp.float32)

    # Deterministic parameter init matching the PyTorch module defaults.
    alpha = jnp.ones((input_dim,), dtype=jnp.float32)   # 'ones' initializer
    beta = jnp.zeros((input_dim,), dtype=jnp.float32)   # 'zeros' initializer

    # NOTE: at this tiny size a plain jnp expression would win; the Pallas path
    # is exercised here for validation and pays off once x is several MiB.
    out = atu_forward(x, alpha, beta)
    out = jax.block_until_ready(out)

    # Reference check (plain JAX, same semantics as the PyTorch broadcast).
    ref = alpha * x + beta
    assert out.shape == x.shape
    assert jnp.allclose(out, ref, atol=1e-6), "mismatch vs reference"

    print("KERNEL_OK")
</pallas_src>

<mosaic_0001>
module attributes {stable_mosaic.version = 11 : i64} {
  func.func @atu_kernel(%arg0: i32, %arg1: memref<4x128xf32, #tpu.memory_space<vmem>>, %arg2: memref<1x128xf32, #tpu.memory_space<vmem>>, %arg3: memref<1x128xf32, #tpu.memory_space<vmem>>, %arg4: memref<4x128xf32, #tpu.memory_space<vmem>>) attributes {dimension_semantics = [#tpu.dimension_semantics<parallel>], iteration_bounds = array<i64: 1>, scalar_prefetch = 0 : i64, scratch_operands = 0 : i64, tpu.core_type = #tpu.core_type<tc>, window_params = [{transform_indices = @transform_0, window_bounds = array<i64: 4, 128>}, {pipeline_mode = #tpu.pipeline_mode<synchronous>, transform_indices = @transform_1, window_bounds = array<i64: 1, 128>}, {pipeline_mode = #tpu.pipeline_mode<synchronous>, transform_indices = @transform_2, window_bounds = array<i64: 1, 128>}, {transform_indices = @transform_3, window_bounds = array<i64: 4, 128>}]} {
    %c0 = arith.constant 0 : index
    %c0_0 = arith.constant 0 : index
    %0 = vector.load %arg1[%c0, %c0_0] : memref<4x128xf32, #tpu.memory_space<vmem>>, vector<4x128xf32>
    %c0_1 = arith.constant 0 : index
    %c0_2 = arith.constant 0 : index
    %1 = vector.load %arg2[%c0_1, %c0_2] : memref<1x128xf32, #tpu.memory_space<vmem>>, vector<1x128xf32>
    %2 = vector.broadcast %1 : vector<1x128xf32> to vector<4x128xf32>
    %3 = arith.mulf %0, %2 : vector<4x128xf32>
    %c0_3 = arith.constant 0 : index
    %c0_4 = arith.constant 0 : index
    %4 = vector.load %arg3[%c0_3, %c0_4] : memref<1x128xf32, #tpu.memory_space<vmem>>, vector<1x128xf32>
    %5 = vector.broadcast %4 : vector<1x128xf32> to vector<4x128xf32>
    %6 = arith.addf %3, %5 : vector<4x128xf32>
    %c0_5 = arith.constant 0 : index
    %c0_6 = arith.constant 0 : index
    %7 = vector.load %arg4[%c0_5, %c0_6] : memref<4x128xf32, #tpu.memory_space<vmem>>, vector<4x128xf32>
    tpu.vector_store %arg4[%c0_5, %c0_6], %6 {strides = array<i32>} : memref<4x128xf32, #tpu.memory_space<vmem>>, vector<4x128xf32>,
    return
  }
  func.func @transform_0(%arg0: i32) -> (i32, i32) {
    %c0_i32 = arith.constant 0 : i32
    %c0_i32_0 = arith.constant 0 : i32
    return %arg0, %c0_i32 : i32, i32
  }
  func.func @transform_1(%arg0: i32) -> (i32, i32) {
    %c0_i32 = arith.constant 0 : i32
    %c0_i32_0 = arith.constant 0 : i32
    %c0_i32_1 = arith.constant 0 : i32
    return %c0_i32, %c0_i32_0 : i32, i32
  }
  func.func @transform_2(%arg0: i32) -> (i32, i32) {
    %c0_i32 = arith.constant 0 : i32
    %c0_i32_0 = arith.constant 0 : i32
    %c0_i32_1 = arith.constant 0 : i32
    return %c0_i32, %c0_i32_0 : i32, i32
  }
  func.func @transform_3(%arg0: i32) -> (i32, i32) {
    %c0_i32 = arith.constant 0 : i32
    %c0_i32_0 = arith.constant 0 : i32
    return %arg0, %c0_i32 : i32, i32
  }
}

</mosaic_0001>

<llo_original>
// kernel: tpu_custom_call.1
$region0: #{tpu_custom_call.1}
  #allocation0 [shape = 'u32[]', space=smem, size = 0x4, offset = 0x4, fixed_abs, tag = 'smem constant byte address 0x4 - core index']
  #allocation1 [shape = 'u32[144,128]{1,0:T(1,128)}', space=vmem, size = 0x12000, scoped, tag = 'internal scratch']
  %s0 = inlined_call_operand.hbm [shape: f32[4,128], index: 0, kind: input, shape index: {}]
  %s1 = inlined_call_operand.vmem [shape: f32[1,128], index: 1, kind: input, shape index: {}]
  %s2 = inlined_call_operand.vmem [shape: f32[1,128], index: 2, kind: input, shape index: {}]
  %s3 = inlined_call_operand.hbm [shape: f32[4,128], index: 3, kind: output, shape index: {}]
  %s4 = sld [smem:[#allocation0]]
  $region26: #{tpu_custom_call.1} parent=0
    _
  %s6 = ssub.s32 1, %s4
  %s7 = scalar_select 0, %s6, %s4
  $region1: #{tpu_custom_call.1} parent=0
    #allocation2 [shape = 'u8[2048]{0}', space=vmem, size = 0x800, scoped, tag = 'input window, operand 0, single buffered']
    #allocation3 [shape = 's32[1]{0}', space=sflag, size = 0x4, scoped, tag = 'scoped memory for tpu_custom_call.1']
    #allocation4 [shape = 's32[1]{0}', space=sflag, size = 0x4, scoped, tag = 'scoped memory for tpu_custom_call.1']
    #allocation5 [shape = 'u8[2048]{0}', space=vmem, size = 0x800, scoped, tag = 'output window, operand 0, single buffered']
    %8 = vsyncpa [#allocation3], 0
    %9 = vsyncpa [#allocation4], 0
    // Predicated region
    $region2: #{tpu_custom_call.1} parent=1 // pred_check
      _
    $region3: #{tpu_custom_call.1} parent=1 // pred_check_branch
      %11 = sbr.rel (0) target = $region5
    $region4: #{tpu_custom_call.1} parent=1 // pred_region
      %s13 = ssub.s32 64, 64
      %14 = vsyncadd [#allocation3], %s13
      %s16 = sshll.u32 [#allocation2], 4
      %s17 = int_to_ptr.vmem [resolvable:$true] %s16
      %19 = dma.hbm_to_vmem [thread:$0]  %s0, 64, %s17, [#allocation3]
    $region5: #{tpu_custom_call.1} parent=1 // pred_fallthru
      _
    // Predicated region
    $region6: #{tpu_custom_call.1} parent=1 // pred_check
      _
    $region7: #{tpu_custom_call.1} parent=1 // pred_check_branch
      %21 = sbr.rel (0) target = $region9
    $region8: #{tpu_custom_call.1} parent=1 // pred_region
      _
    $region9: #{tpu_custom_call.1} parent=1 // pred_fallthru
      _
    // Predicated region
    $region10: #{tpu_custom_call.1} parent=1 // pred_check
      _
    $region11: #{tpu_custom_call.1} parent=1 // pred_check_branch
      %23 = sbr.rel (0) target = $region13
    $region12: #{tpu_custom_call.1} parent=1 // pred_region
      _
    $region13: #{tpu_custom_call.1} parent=1 // pred_fallthru
      _
    // Predicated region
    $region14: #{tpu_custom_call.1} parent=1 // pred_check
      _
    $region15: #{tpu_custom_call.1} parent=1 // pred_check_branch
      %25 = sbr.rel (0) target = $region17
    $region16: #{tpu_custom_call.1} parent=1 // pred_region
      %26 = dma.done [#allocation3], 64
    $region17: #{tpu_custom_call.1} parent=1 // pred_fallthru
      _
    %v27 = vld [vmem:[#allocation2] sm:$0xf]
    %v28 = vld [vmem:[%s1] sm:$0x1]
    %v30 = vlaneseq
    %v31 = vshrl.u32 %v30, 7
    %v32 = vsub.s32 0, %v31
    %v33 = vrot.slane %v28, %v32
    %v35 = vmul.f32 %v27, %v33
    %v36 = vld [vmem:[%s2] sm:$0x1]
    %v38 = vlaneseq
    %v39 = vshrl.u32 %v38, 7
    %v40 = vsub.s32 0, %v39
    %v41 = vrot.slane %v36, %v40
    %v43 = vadd.f32 %v35, %v41
    %44 = vst [vmem:[#allocation5] sm:$0xf] %v43
    // Predicated region
    $region18: #{tpu_custom_call.1} parent=1 // pred_check
      _
    $region19: #{tpu_custom_call.1} parent=1 // pred_check_branch
      %46 = sbr.rel (0) target = $region21
    $region20: #{tpu_custom_call.1} parent=1 // pred_region
      %s48 = ssub.s32 64, 64
      %49 = vsyncadd [#allocation4], %s48
      %s51 = sshll.u32 [#allocation5], 4
      %s52 = int_to_ptr.vmem [resolvable:$true] %s51
      %54 = dma.vmem_to_hbm [thread:$0]  %s52, 64, %s3, [#allocation4]
    $region21: #{tpu_custom_call.1} parent=1 // pred_fallthru
      _
    // Predicated region
    $region22: #{tpu_custom_call.1} parent=1 // pred_check
      _
    $region23: #{tpu_custom_call.1} parent=1 // pred_check_branch
      %56 = sbr.rel (0) target = $region25
    $region24: #{tpu_custom_call.1} parent=1 // pred_region
      %57 = dma.done [#allocation4], 64
    $region25: #{tpu_custom_call.1} parent=1 // pred_fallthru
      _
    %58 = vsyncpa [#allocation3], 1
    %59 = vsyncpa [#allocation4], 1

</llo_original>
